<compile_context>
chip_gen: v7x
topology: tpu7x:2x2x1
jax: 0.10.0
libtpu: 0.0.40
codegen_flags: <defaults>
</compile_context>

<pallas_src>
import jax
import jax.numpy as jnp
from jax import lax
from jax.experimental import pallas as pl
from jax.experimental.pallas import tpu as pltpu


def _channel_attention_kernel(x_ref, wqkv_ref, wp_ref, bp_ref, o_ref):
    _, C, N = x_ref.shape
    x = x_ref[0]                                  # (C, N) f32, lane-dense
    xb = x.astype(jnp.bfloat16)
    wqkv = wqkv_ref[...]                          # (3C, C) bf16, scale folded into Wq
    wp = wp_ref[...]                              # (C, C)  bf16
    bp = bp_ref[...]                              # (C, 1)  f32

    # Fused q/k/v projection: one MXU pass, channel-major (3C, N) result.
    qkv = jnp.dot(wqkv, xb, preferred_element_type=jnp.float32)       # (3C, N) f32
    qT = qkv[:C].astype(jnp.bfloat16)             # (C, N) == q^T (scale pre-folded)
    kT = qkv[C:2 * C].astype(jnp.bfloat16)        # (C, N) == k^T
    vT = qkv[2 * C:].astype(jnp.bfloat16)         # (C, N) == v^T

    # scores[i, j] = sum_c q^T[c, i] * k^T[c, j]  — contract C directly from the
    # channel-major slabs; no explicit transpose, no (N, C) intermediate.
    s = lax.dot_general(qT, kT, (((0,), (0,)), ((), ())),
                        preferred_element_type=jnp.float32)           # (N, N)

    # numerically-stable softmax over the key axis (f32; reciprocal on the EUP)
    s = s - jnp.max(s, axis=-1, keepdims=True)
    p = jnp.exp(s)
    p = p * pl.reciprocal(jnp.sum(p, axis=-1, keepdims=True), approx=True)

    # (attn @ v)^T in channel-major: outT[c, i] = sum_j v^T[c, j] * p[i, j]
    outT = lax.dot_general(vT, p.astype(jnp.bfloat16),
                           (((1,), (1,)), ((), ())),
                           preferred_element_type=jnp.float32)        # (C, N)

    # output projection (Linear with bias), then the channel-attention gate
    outT = jnp.dot(wp, outT.astype(jnp.bfloat16),
                   preferred_element_type=jnp.float32) + bp           # (C, N)
    o_ref[0] = jax.nn.sigmoid(outT) * x


def channel_attention(x, w_qkv, w_proj, b_proj, num_heads=4):
    """x: (B, C, H, W) float32.  Returns (B, C, H, W) float32."""
    B, C, H, W = x.shape
    N = H * W
    scale = float((C // num_heads) ** (-0.5))

    # NCHW is already channel-major: (B, C, N) with N on the lane axis -> no transpose.
    x_cn = x.reshape(B, C, N).astype(jnp.float32)

    # Fold the attention scale into Wq (one-time O(C^2) op, f32) and fuse q/k/v
    # weights into a single operand; matmul operands bf16, f32 accumulation in-kernel.
    w_qkv = w_qkv.astype(jnp.float32)
    wqkv = jnp.concatenate([w_qkv[:C] * scale, w_qkv[C:]], axis=0)     # (3C, C)
    wqkv = wqkv.astype(jnp.bfloat16)
    wp = w_proj.astype(jnp.bfloat16)                                   # (C, C)
    bp = b_proj.reshape(C, 1).astype(jnp.float32)                      # (C, 1)

    # Explicit VMEM budget: double-buffered x/out blocks + weights + the live f32
    # (N, N) score/prob intermediates, with headroom; clamp for v7x's 64 MiB VMEM.
    bytes_x = C * N * 4
    bytes_w = (3 * C * C + C * C) * 2 + C * 4
    bytes_nn = N * N * 4
    est = 2 * (2 * bytes_x) + bytes_w + 4 * bytes_nn + (4 << 20)
    vmem_limit = int(min(max(est, 16 << 20), 64 << 20))

    out_cn = pl.pallas_call(
        _channel_attention_kernel,
        out_shape=jax.ShapeDtypeStruct((B, C, N), jnp.float32),
        grid_spec=pltpu.PrefetchScalarGridSpec(
            num_scalar_prefetch=0,
            grid=(B,),                                               # one batch / step
            in_specs=[
                pl.BlockSpec((1, C, N), lambda b: (b, 0, 0)),        # x, channel-major
                pl.BlockSpec((3 * C, C), lambda b: (0, 0)),          # fused Wqkv
                pl.BlockSpec((C, C), lambda b: (0, 0)),              # Wproj
                pl.BlockSpec((C, 1), lambda b: (0, 0)),              # proj bias
            ],
            out_specs=pl.BlockSpec((1, C, N), lambda b: (b, 0, 0)),
        ),
        compiler_params=pltpu.CompilerParams(
            dimension_semantics=("parallel",),
            vmem_limit_bytes=vmem_limit),
    )(x_cn, wqkv, wp, bp)

    # (B, C, N) -> NCHW is a pure reshape (no transpose).
    return out_cn.reshape(B, C, H, W)


def _channel_attention_ref(x, w_qkv, w_proj, b_proj, num_heads=4):
    """Pure-JAX f32 reference matching the PyTorch forward."""
    B, C, H, W = x.shape
    N = H * W
    scale = (C // num_heads) ** (-0.5)
    xt = x.reshape(B, C, N).transpose(0, 2, 1)                        # (B, N, C)
    qkv = jnp.einsum('bnc,dc->bnd', xt, w_qkv)                        # (B, N, 3C)
    q, k, v = qkv[..., :C], qkv[..., C:2 * C], qkv[..., 2 * C:]
    attn = jax.nn.softmax(jnp.einsum('bic,bjc->bij', q, k) * scale, axis=-1)
    out = jnp.einsum('bij,bjc->bic', attn, v)
    out = jnp.einsum('bnc,dc->bnd', out, w_proj) + b_proj
    out = out.transpose(0, 2, 1).reshape(B, C, H, W)
    return jax.nn.sigmoid(out) * x


if __name__ == "__main__":
    B, C, H, W = 2, 4, 16, 16
    num_heads = 4

    key = jax.random.PRNGKey(0)
    k_x, k_qkv, k_p, k_b = jax.random.split(key, 4)

    x = jax.random.normal(k_x, (B, C, H, W), dtype=jnp.float32)

    # Deterministic parameter init (PyTorch-Linear-like uniform bound 1/sqrt(fan_in)).
    bound = 1.0 / (C ** 0.5)
    w_qkv = jax.random.uniform(k_qkv, (3 * C, C), jnp.float32, -bound, bound)
    w_proj = jax.random.uniform(k_p, (C, C), jnp.float32, -bound, bound)
    b_proj = jax.random.uniform(k_b, (C,), jnp.float32, -bound, bound)

    out = channel_attention(x, w_qkv, w_proj, b_proj, num_heads=num_heads)
    jax.block_until_ready(out)

    assert out.shape == (B, C, H, W), out.shape
    assert bool(jnp.all(jnp.isfinite(out)))

    # Tolerance-asserted pure-JAX reference (bf16 matmuls + approx reciprocal in-kernel).
    ref = _channel_attention_ref(x, w_qkv, w_proj, b_proj, num_heads=num_heads)
    assert bool(jnp.allclose(out, ref, rtol=5e-2, atol=5e-2)), (
        float(jnp.max(jnp.abs(out - ref))))

    print("KERNEL_OK")
</pallas_src>

<mosaic_0001>
module attributes {stable_mosaic.version = 11 : i64} {
  func.func @_channel_attention_kernel(%arg0: i32, %arg1: memref<1x4x256xf32, #tpu.memory_space<vmem>>, %arg2: memref<12x4xbf16, #tpu.memory_space<vmem>>, %arg3: memref<4x4xbf16, #tpu.memory_space<vmem>>, %arg4: memref<4x1xf32, #tpu.memory_space<vmem>>, %arg5: memref<1x4x256xf32, #tpu.memory_space<vmem>>) attributes {dimension_semantics = [#tpu.dimension_semantics<parallel>], iteration_bounds = array<i64: 2>, scalar_prefetch = 0 : i64, scratch_operands = 0 : i64, tpu.core_type = #tpu.core_type<tc>, window_params = [{transform_indices = @transform_0, window_bounds = array<i64: 1, 4, 256>}, {pipeline_mode = #tpu.pipeline_mode<synchronous>, transform_indices = @transform_1, window_bounds = array<i64: 12, 4>}, {pipeline_mode = #tpu.pipeline_mode<synchronous>, transform_indices = @transform_2, window_bounds = array<i64: 4, 4>}, {pipeline_mode = #tpu.pipeline_mode<synchronous>, transform_indices = @transform_3, window_bounds = array<i64: 4, 1>}, {transform_indices = @transform_4, window_bounds = array<i64: 1, 4, 256>}]} {
    %c0 = arith.constant 0 : index
    %c0_0 = arith.constant 0 : index
    %c0_1 = arith.constant 0 : index
    %0 = vector.load %arg1[%c0, %c0_0, %c0_1] : memref<1x4x256xf32, #tpu.memory_space<vmem>>, vector<1x4x256xf32>
    %1 = vector.shape_cast %0 : vector<1x4x256xf32> to vector<4x256xf32>
    %2 = arith.truncf %1 : vector<4x256xf32> to vector<4x256xbf16>
    %c0_2 = arith.constant 0 : index
    %c0_3 = arith.constant 0 : index
    %3 = vector.load %arg2[%c0_2, %c0_3] : memref<12x4xbf16, #tpu.memory_space<vmem>>, vector<12x4xbf16>
    %c0_4 = arith.constant 0 : index
    %c0_5 = arith.constant 0 : index
    %4 = vector.load %arg3[%c0_4, %c0_5] : memref<4x4xbf16, #tpu.memory_space<vmem>>, vector<4x4xbf16>
    %c0_6 = arith.constant 0 : index
    %c0_7 = arith.constant 0 : index
    %5 = vector.load %arg4[%c0_6, %c0_7] : memref<4x1xf32, #tpu.memory_space<vmem>>, vector<4x1xf32>
    %cst = arith.constant dense<0.000000e+00> : vector<12x256xf32>
    %6 = tpu.matmul %3, %2, %cst {dimension_numbers = #tpu.dot_dimension_numbers<[1], [0], [0], [1], [0, 0, 1, 1], [], []>} : vector<12x4xbf16>, vector<4x256xbf16>, vector<12x256xf32> -> vector<12x256xf32>
    %7 = vector.extract_strided_slice %6 {offsets = [0, 0], sizes = [4, 256], strides = [1, 1]} : vector<12x256xf32> to vector<4x256xf32>
    %8 = arith.truncf %7 : vector<4x256xf32> to vector<4x256xbf16>
    %9 = vector.extract_strided_slice %6 {offsets = [4, 0], sizes = [4, 256], strides = [1, 1]} : vector<12x256xf32> to vector<4x256xf32>
    %10 = arith.truncf %9 : vector<4x256xf32> to vector<4x256xbf16>
    %11 = vector.extract_strided_slice %6 {offsets = [8, 0], sizes = [4, 256], strides = [1, 1]} : vector<12x256xf32> to vector<4x256xf32>
    %12 = arith.truncf %11 : vector<4x256xf32> to vector<4x256xbf16>
    %cst_8 = arith.constant dense<0.000000e+00> : vector<256x256xf32>
    %13 = tpu.matmul %8, %10, %cst_8 {dimension_numbers = #tpu.dot_dimension_numbers<[0], [0], [1], [1], [0, 1, 1, 1], [], []>} : vector<4x256xbf16>, vector<4x256xbf16>, vector<256x256xf32> -> vector<256x256xf32>
    %cst_9 = arith.constant dense<0xFF800000> : vector<256xf32>
    %14 = vector.multi_reduction <maximumf>, %13, %cst_9 [1] : vector<256x256xf32> to vector<256xf32>
    %15 = vector.shape_cast %14 : vector<256xf32> to vector<256x1xf32>
    %16 = vector.broadcast %15 : vector<256x1xf32> to vector<256x256xf32>
    %17 = arith.subf %13, %16 : vector<256x256xf32>
    %18 = math.exp %17 : vector<256x256xf32>
    %cst_10 = arith.constant dense<0.000000e+00> : vector<256xf32>
    %19 = vector.multi_reduction <add>, %18, %cst_10 [1] : vector<256x256xf32> to vector<256xf32>
    %20 = vector.shape_cast %19 : vector<256xf32> to vector<256x1xf32>
    %21 = tpu.reciprocal %20 {approx = true} : vector<256x1xf32> -> vector<256x1xf32>
    %22 = vector.broadcast %21 : vector<256x1xf32> to vector<256x256xf32>
    %23 = arith.mulf %18, %22 : vector<256x256xf32>
    %24 = arith.truncf %23 : vector<256x256xf32> to vector<256x256xbf16>
    %cst_11 = arith.constant dense<0.000000e+00> : vector<4x256xf32>
    %25 = tpu.matmul %12, %24, %cst_11 {dimension_numbers = #tpu.dot_dimension_numbers<[1], [1], [0], [0], [0, 0, 1, 0], [], []>} : vector<4x256xbf16>, vector<256x256xbf16>, vector<4x256xf32> -> vector<4x256xf32>
    %26 = arith.truncf %25 : vector<4x256xf32> to vector<4x256xbf16>
    %cst_12 = arith.constant dense<0.000000e+00> : vector<4x256xf32>
    %27 = tpu.matmul %4, %26, %cst_12 {dimension_numbers = #tpu.dot_dimension_numbers<[1], [0], [0], [1], [0, 0, 1, 1], [], []>} : vector<4x4xbf16>, vector<4x256xbf16>, vector<4x256xf32> -> vector<4x256xf32>
    %28 = vector.broadcast %5 : vector<4x1xf32> to vector<4x256xf32>
    %29 = arith.addf %27, %28 : vector<4x256xf32>
    %30 = arith.negf %29 : vector<4x256xf32>
    %31 = math.exp %30 : vector<4x256xf32>
    %cst_13 = arith.constant 1.000000e+00 : f32
    %32 = vector.broadcast %cst_13 : f32 to vector<4x256xf32>
    %33 = arith.addf %32, %31 : vector<4x256xf32>
    %34 = arith.divf %32, %33 : vector<4x256xf32>
    %35 = arith.mulf %34, %1 : vector<4x256xf32>
    %c0_14 = arith.constant 0 : index
    %c0_15 = arith.constant 0 : index
    %c0_16 = arith.constant 0 : index
    %36 = vector.load %arg5[%c0_14, %c0_15, %c0_16] : memref<1x4x256xf32, #tpu.memory_space<vmem>>, vector<1x4x256xf32>
    %37 = vector.shape_cast %36 : vector<1x4x256xf32> to vector<4x256xf32>
    %38 = vector.shape_cast %35 : vector<4x256xf32> to vector<1x4x256xf32>
    tpu.vector_store %arg5[%c0_14, %c0_15, %c0_16], %38 {strides = array<i32>} : memref<1x4x256xf32, #tpu.memory_space<vmem>>, vector<1x4x256xf32>,
    return
  }
  func.func @transform_0(%arg0: i32) -> (i32, i32, i32) {
    %c0_i32 = arith.constant 0 : i32
    %c0_i32_0 = arith.constant 0 : i32
    %c0_i32_1 = arith.constant 0 : i32
    return %arg0, %c0_i32, %c0_i32_0 : i32, i32, i32
  }
  func.func @transform_1(%arg0: i32) -> (i32, i32) {
    %c0_i32 = arith.constant 0 : i32
    %c0_i32_0 = arith.constant 0 : i32
    %c0_i32_1 = arith.constant 0 : i32
    return %c0_i32, %c0_i32_0 : i32, i32
  }
  func.func @transform_2(%arg0: i32) -> (i32, i32) {
    %c0_i32 = arith.constant 0 : i32
    %c0_i32_0 = arith.constant 0 : i32
    %c0_i32_1 = arith.constant 0 : i32
    return %c0_i32, %c0_i32_0 : i32, i32
  }
  func.func @transform_3(%arg0: i32) -> (i32, i32) {
    %c0_i32 = arith.constant 0 : i32
    %c0_i32_0 = arith.constant 0 : i32
    %c0_i32_1 = arith.constant 0 : i32
    return %c0_i32, %c0_i32_0 : i32, i32
  }
  func.func @transform_4(%arg0: i32) -> (i32, i32, i32) {
    %c0_i32 = arith.constant 0 : i32
    %c0_i32_0 = arith.constant 0 : i32
    %c0_i32_1 = arith.constant 0 : i32
    return %arg0, %c0_i32, %c0_i32_0 : i32, i32, i32
  }
}

</mosaic_0001>

<llo_original>
// kernel: tpu_custom_call.1
$region0: #{tpu_custom_call.1}
  #allocation0 [shape = 'u32[]', space=smem, size = 0x4, offset = 0x4, fixed_abs, tag = 'smem constant byte address 0x4 - core index']
  #allocation1 [shape = 'u32[144,128]{1,0:T(1,128)}', space=vmem, size = 0x12000, scoped, tag = 'internal scratch']
  %s0 = inlined_call_operand.hbm [shape: f32[2,4,256], index: 0, kind: input, shape index: {}]
  %s1 = inlined_call_operand.vmem [shape: bf16[12,4], index: 1, kind: input, shape index: {}]
  %s2 = inlined_call_operand.vmem [shape: bf16[4,4], index: 2, kind: input, shape index: {}]
  %s3 = inlined_call_operand.vmem [shape: f32[4,1], index: 3, kind: input, shape index: {}]
  %s4 = inlined_call_operand.hbm [shape: f32[2,4,256], index: 4, kind: output, shape index: {}]
  %s5 = sld [smem:[#allocation0]]
  $region53: #{tpu_custom_call.1} parent=0
    _
  %s7 = ssub.s32 1, %s5
  %s8 = scalar_select 0, %s7, %s5
  $region1: #{tpu_custom_call.1} parent=0
    #allocation2 [shape = 'u8[8192]{0}', space=vmem, size = 0x2000, scoped, tag = 'input window, operand 0']
    #allocation3 [shape = 's32[2]{0}', space=sflag, size = 0x8, scoped, tag = 'scoped memory for tpu_custom_call.1']
    #allocation4 [shape = 's32[2]{0}', space=sflag, size = 0x8, scoped, tag = 'scoped memory for tpu_custom_call.1']
    #allocation5 [shape = 'u8[8192]{0}', space=vmem, size = 0x2000, scoped, tag = 'output window, operand 0']
    %9 = vsyncpa [#allocation3], 0
    %s10 = scalar_lea.sflag [#allocation3], 1
    %11 = vsyncpa %s10, 0
    %12 = vsyncpa [#allocation4], 0
    %s13 = scalar_lea.sflag [#allocation4], 1
    %14 = vsyncpa %s13, 0
    loop: start=0, step=1, limit=4
    $region2: #{tpu_custom_call.1} parent=1 // loop_pre_header
      _
    $region3: #{tpu_custom_call.1} parent=1 // loop_header
      %s16 = sphi 0, %s20
      %p17 = scmp.ge.s32.totalorder %s16, 4
      %s26 = sphi 0, %s28
      %s29 = sphi 0, %s26
      %s30 = sphi 0, %s29
      %s46 = sphi 0, %s30
      %s50 = sphi 0, %s50
      %s52 = sphi 0, %s50
      %s53 = sphi 0, %s52
      %s67 = sphi 0, %s53
      %s71 = sphi 0, %s71
      %s73 = sphi 0, %s71
      %s74 = sphi 0, %s73
      %s88 = sphi 0, %s74
      %s92 = sphi 0, %s92
      %s94 = sphi 0, %s92
      %s95 = sphi 0, %s94
      %s109 = sphi 0, %s95
      %s115 = sphi 0, %s117
      %s118 = sphi 0, %s115
      %s119 = sphi 0, %s118
      %s135 = sphi 0, %s119
    $region4: #{tpu_custom_call.1} parent=1 // loop_header_branch
      %19 = sbr.rel (%p17) target = $region8
    $region5: #{tpu_custom_call.1} parent=1 // loop_body
      %s21 = ssub.s32 %s16, 1
      %s22 = ssub.s32 %s16, 2
      %s23 = sadd.s32 %s16, 1
      %s24 = ssub.s32 %s16, %s23
      %p25 = scmp.eq.s32.totalorder %s24, 0
      %s27 = sadd.s32 %s26, 1
      %s28 = scalar_select %p25, %s26, %s27
      %p31 = pneg %p25
      %p32 = scmp.eq.s32.totalorder %s16, 1
      %p33 = por %p31, %p32
      %p34 = scmp.ne.s32.totalorder %s26, %s29
      %p35 = scmp.eq.s32.totalorder %s16, 0
      %p36 = por %p34, %p35
      %p37 = scmp.ne.s32.totalorder %s26, %s29
      %p38 = scmp.eq.s32.totalorder %s21, 1
      %p39 = por %p37, %p38
      %p40 = scmp.ne.s32.totalorder %s29, %s30
      %p41 = scmp.eq.s32.totalorder %s21, 0
      %p42 = por %p40, %p41
      %p43 = scmp.ne.s32.totalorder %s29, %s30
      %p44 = scmp.eq.s32.totalorder %s22, 1
      %p45 = por %p43, %p44
      %p47 = scmp.ne.s32.totalorder %s30, %s46
      %p48 = scmp.eq.s32.totalorder %s22, 0
      %p49 = por %p47, %p48
      %s51 = sadd.s32 %s50, 1
      %p54 = scmp.eq.s32.totalorder %s16, 1
      %p55 = scmp.ne.s32.totalorder %s50, %s52
      %p56 = scmp.eq.s32.totalorder %s16, 0
      %p57 = por %p55, %p56
      %p58 = scmp.ne.s32.totalorder %s50, %s52
      %p59 = scmp.eq.s32.totalorder %s21, 1
      %p60 = por %p58, %p59
      %p61 = scmp.ne.s32.totalorder %s52, %s53
      %p62 = scmp.eq.s32.totalorder %s21, 0
      %p63 = por %p61, %p62
      %p64 = scmp.ne.s32.totalorder %s52, %s53
      %p65 = scmp.eq.s32.totalorder %s22, 1
      %p66 = por %p64, %p65
      %p68 = scmp.ne.s32.totalorder %s53, %s67
      %p69 = scmp.eq.s32.totalorder %s22, 0
      %p70 = por %p68, %p69
      %s72 = sadd.s32 %s71, 1
      %p75 = scmp.eq.s32.totalorder %s16, 1
      %p76 = scmp.ne.s32.totalorder %s71, %s73
      %p77 = scmp.eq.s32.totalorder %s16, 0
      %p78 = por %p76, %p77
      %p79 = scmp.ne.s32.totalorder %s71, %s73
      %p80 = scmp.eq.s32.totalorder %s21, 1
      %p81 = por %p79, %p80
      %p82 = scmp.ne.s32.totalorder %s73, %s74
      %p83 = scmp.eq.s32.totalorder %s21, 0
      %p84 = por %p82, %p83
      %p85 = scmp.ne.s32.totalorder %s73, %s74
      %p86 = scmp.eq.s32.totalorder %s22, 1
      %p87 = por %p85, %p86
      %p89 = scmp.ne.s32.totalorder %s74, %s88
      %p90 = scmp.eq.s32.totalorder %s22, 0
      %p91 = por %p89, %p90
      %s93 = sadd.s32 %s92, 1
      %p96 = scmp.eq.s32.totalorder %s16, 1
      %p97 = scmp.ne.s32.totalorder %s92, %s94
      %p98 = scmp.eq.s32.totalorder %s16, 0
      %p99 = por %p97, %p98
      %p100 = scmp.ne.s32.totalorder %s92, %s94
      %p101 = scmp.eq.s32.totalorder %s21, 1
      %p102 = por %p100, %p101
      %p103 = scmp.ne.s32.totalorder %s94, %s95
      %p104 = scmp.eq.s32.totalorder %s21, 0
      %p105 = por %p103, %p104
      %p106 = scmp.ne.s32.totalorder %s94, %s95
      %p107 = scmp.eq.s32.totalorder %s22, 1
      %p108 = por %p106, %p107
      %p110 = scmp.ne.s32.totalorder %s95, %s109
      %p111 = scmp.eq.s32.totalorder %s22, 0
      %p112 = por %p110, %p111
      %s113 = ssub.s32 %s16, %s23
      %p114 = scmp.eq.s32.totalorder %s113, 0
      %s116 = sadd.s32 %s115, 1
      %s117 = scalar_select %p114, %s115, %s116
      %p120 = pneg %p114
      %p121 = scmp.eq.s32.totalorder %s16, 1
      %p122 = por %p120, %p121
      %p123 = scmp.ne.s32.totalorder %s115, %s118
      %p124 = scmp.eq.s32.totalorder %s16, 0
      %p125 = por %p123, %p124
      %p126 = scmp.ne.s32.totalorder %s115, %s118
      %p127 = scmp.eq.s32.totalorder %s21, 1
      %p128 = por %p126, %p127
      %p129 = scmp.ne.s32.totalorder %s118, %s119
      %p130 = scmp.eq.s32.totalorder %s21, 0
      %p131 = por %p129, %p130
      %p132 = scmp.ne.s32.totalorder %s118, %s119
      %p133 = scmp.eq.s32.totalorder %s22, 1
      %p134 = por %p132, %p133
      %p136 = scmp.ne.s32.totalorder %s119, %s135
      %p137 = scmp.eq.s32.totalorder %s22, 0
      %p138 = por %p136, %p137
      %p139 = scmp.le.s32.totalorder 1, %s16
      %p140 = scmp.lt.s32.totalorder %s16, 3
      %p141 = pnand %p139, %p140
      %p142 = pneg %p141
      // Predicated region
      $region9: #{tpu_custom_call.1} parent=5 // pred_check
        _
      $region10: #{tpu_custom_call.1} parent=5 // pred_check_branch
        %144 = sbr.rel (%p141) target = $region12
      $region11: #{tpu_custom_call.1} parent=5 // pred_region
        %s145 = ssub.s32 %s16, 1
        // Predicated region
        $region13: #{tpu_custom_call.1} parent=11 // pred_check
          %p146 = pneg %p63
        $region14: #{tpu_custom_call.1} parent=11 // pred_check_branch
          %148 = sbr.rel (%p146) target = $region16
        $region15: #{tpu_custom_call.1} parent=11 // pred_region
          _
        $region16: #{tpu_custom_call.1} parent=11 // pred_fallthru
          _
        // Predicated region
        $region17: #{tpu_custom_call.1} parent=11 // pred_check
          %p149 = pneg %p84
        $region18: #{tpu_custom_call.1} parent=11 // pred_check_branch
          %151 = sbr.rel (%p149) target = $region20
        $region19: #{tpu_custom_call.1} parent=11 // pred_region
          _
        $region20: #{tpu_custom_call.1} parent=11 // pred_fallthru
          _
        // Predicated region
        $region21: #{tpu_custom_call.1} parent=11 // pred_check
          %p152 = pneg %p105
        $region22: #{tpu_custom_call.1} parent=11 // pred_check_branch
          %154 = sbr.rel (%p152) target = $region24
        $region23: #{tpu_custom_call.1} parent=11 // pred_region
          _
        $region24: #{tpu_custom_call.1} parent=11 // pred_fallthru
          _
      $region12: #{tpu_custom_call.1} parent=5 // pred_fallthru
        _
      %p155 = scmp.lt.s32.totalorder %s16, 2
      // Predicated region
      $region25: #{tpu_custom_call.1} parent=5 // pred_check
        %p156 = pneg %p155
      $region26: #{tpu_custom_call.1} parent=5 // pred_check_branch
        %158 = sbr.rel (%p156) target = $region28
      $region27: #{tpu_custom_call.1} parent=5 // pred_region
        // Predicated region
        $region29: #{tpu_custom_call.1} parent=27 // pred_check
          %p159 = pneg %p36
        $region30: #{tpu_custom_call.1} parent=27 // pred_check_branch
          %161 = sbr.rel (%p159) target = $region32
        $region31: #{tpu_custom_call.1} parent=27 // pred_region
          %s162 = sand.u32 %s26, 1
          %s163 = scalar_lea.sflag [#allocation3], %s162
          %s164 = sand.u32 %s26, 1
          %s165 = smul.addr %s164, 8
          %s166 = scalar_lea.vmem [#allocation2], %s165
          %s168 = ssub.s32 128, 128
          %169 = vsyncadd %s163, %s168
          %s170 = smul.addr %s16, 2
          %s171 = smul.addr %s170, 64
          %s172 = scalar_lea.hbm %s0, %s171
          %s174 = sshll.u32 %s166, 4
          %s175 = int_to_ptr.vmem [resolvable:$true] %s174
          %177 = dma.hbm_to_vmem [thread:$0]  %s172, 128, %s175, %s163
        $region32: #{tpu_custom_call.1} parent=27 // pred_fallthru
          _
      $region28: #{tpu_custom_call.1} parent=5 // pred_fallthru
        _
      %p178 = scmp.le.s32.totalorder 1, %s16
      %p179 = scmp.lt.s32.totalorder %s16, 3
      %p180 = pnand %p178, %p179
      %p181 = pneg %p180
      // Predicated region
      $region33: #{tpu_custom_call.1} parent=5 // pred_check
        _
      $region34: #{tpu_custom_call.1} parent=5 // pred_check_branch
        %183 = sbr.rel (%p180) target = $region36
      $region35: #{tpu_custom_call.1} parent=5 // pred_region
        %s184 = ssub.s32 %s16, 1
        %s185 = sand.u32 %s29, 1
        %s186 = scalar_lea.sflag [#allocation3], %s185
        %s187 = sand.u32 %s29, 1
        %s188 = smul.addr %s187, 8
        %s189 = scalar_lea.vmem [#allocation2], %s188
        // Predicated region
        $region37: #{tpu_custom_call.1} parent=35 // pred_check
          %p190 = pneg %p42
        $region38: #{tpu_custom_call.1} parent=35 // pred_check_branch
          %192 = sbr.rel (%p190) target = $region40
        $region39: #{tpu_custom_call.1} parent=35 // pred_region
          %193 = dma.done %s186, 128
        $region40: #{tpu_custom_call.1} parent=35 // pred_fallthru
          _
        %s194 = sand.u32 %s29, 1
        %s195 = scalar_lea.sflag [#allocation3], %s194
        %s196 = sand.u32 %s29, 1
        %s197 = smul.addr %s196, 8
        %s198 = scalar_lea.vmem [#allocation2], %s197
        %p199 = pneg %p42
        %p200 = pneg %p39
        %p201 = pneg %p63
        %p202 = pneg %p60
        %p203 = pneg %p84
        %p204 = pneg %p81
        %p205 = pneg %p105
        %p206 = pneg %p102
        %p207 = pneg %p131
        %p208 = pneg %p128
        %s209 = sand.u32 %s118, 1
        %s210 = scalar_lea.sflag [#allocation4], %s209
        %s211 = sand.u32 %s118, 1
        %s212 = smul.addr %s211, 8
        %s213 = scalar_lea.vmem [#allocation5], %s212
        %v215 = vld [vmem:[%s189] sm:$0xff]
        %v217 = vcombine.high %v215, %v215
        %v219 = vpack.c.bf16 %v215, %v215
        %v220 = vpack.c.bf16 %v217, %v217
        %v221 = vld [vmem:[%s1] sm:$0xf]
        %v222 = vld [vmem:[%s1 + $0x4] sm:$0x3]
        %v223 = vld [vmem:[%s2] sm:$0x3]
        %v224 = vld [vmem:[%s3] sm:$0xf]
        %v227 = vunpack.c.l.b16 %v221
        %v228 = vunpack.c.l.b16 %v222
        %v229 = vpack.c.b16 %v228, %v227
        %vm230 = vcmask 31744
        %v232 = vsel %vm230, %v229, 0
        %vm234 = vcmask 1041408
        %v236 = vsel %vm234, %v219, 0
        %v239 = vsel %vm234, %v220, 0
        %241 = vmatprep.subr.bf16.mxu0 %v239
        %242 = vmatpush1.bf16.msra.mxu0 %v236
        %243 = vmatprep.subr.bf16.mxu0 0
        %244 = vmatpush1.bf16.msra.mxu0 0
        %245 = vmatprep.subr.bf16.mxu0 0
        %246 = vmatpush1.bf16.msra.mxu0 0
        %247 = vmatprep.subr.bf16.mxu0 0
        %248 = vmatpush1.bf16.msra.mxu0 0
        %249 = vmatprep.subr.bf16.mxu0 0
        %250 = vmatpush1.bf16.msra.mxu0 0
        %251 = vmatprep.subr.bf16.mxu0 0
        %252 = vmatpush1.bf16.msra.mxu0 0
        %253 = vmatprep.subr.bf16.mxu0 0
        %254 = vmatpush1.bf16.msra.mxu0 0
        %255 = vmatprep.subr.bf16.mxu0 0
        %256 = vmatpush1.bf16.msra.mxu0 0
        %257 = vmatprep.subr.bf16.mxu0 0
        %258 = vmatpush1.bf16.msra.mxu0 0
        %259 = vmatprep.subr.bf16.mxu0 0
        %260 = vmatpush1.bf16.msra.mxu0 0
        %261 = vmatprep.subr.bf16.mxu0 0
        %262 = vmatpush1.bf16.msra.mxu0 0
        %263 = vmatprep.subr.bf16.mxu0 0
        %264 = vmatpush1.bf16.msra.mxu0 0
        %265 = vmatprep.subr.bf16.mxu0 0
        %266 = vmatpush1.bf16.msra.mxu0 0
        %267 = vmatprep.subr.bf16.mxu0 0
        %268 = vmatpush1.bf16.msra.mxu0 0
        %269 = vmatprep.subr.bf16.mxu0 0
        %270 = vmatpush1.bf16.msra.mxu0 0
        %271 = vmatprep.subr.bf16.mxu0 0
        %272 = vmatpush1.bf16.msra.mxu0 0
        %273 = vmatprep.mubr.bf16.mxu0 0
        %274 = vmatmul.mubr.bf16.gmra.mrb[0].mxu0 %v232
        %v275 = vpop.f32.mrb[0].mxu0
        %v276 = vadd.f32 0.0, %v275
        %v277 = vpop.f32.mrb[0].mxu0
        %v278 = vadd.f32 0.0, %v277
        %v279 = vpop.f32.mrb[0].mxu0
        %v280 = vadd.f32 0.0, %v279
        %v281 = vpop.f32.mrb[0].mxu0
        %v282 = vadd.f32 0.0, %v281
        %283 = vdwg.mxu0
        %v284 = vpack.c.bf16 %v276, %v276
        %v285 = vpack.c.bf16 %v278, %v278
        %v286 = vpack.c.bf16 %v280, %v280
        %v287 = vpack.c.bf16 %v282, %v282
        %288 = vxpose.xlu0.c.b16.start [1/8] %v284, 128
        %289 = vxpose.xlu0.c.b16.cont [2/8] 0, 128
        %290 = vxpose.xlu0.c.b16.cont [3/8] 0, 128
        %291 = vxpose.xlu0.c.b16.cont [4/8] 0, 128
        %292 = vxpose.xlu0.c.b16.cont [5/8] 0, 128
        %293 = vxpose.xlu0.c.b16.cont [6/8] 0, 128
        %294 = vxpose.xlu0.c.b16.cont [7/8] 0, 128
        %295 = vxpose.xlu0.c.b16.end [8/8] 0, 128
        %v296 = vpop.trf.xlu0
        %v297 = vpop.trf.xlu0
        %v298 = vpop.trf.xlu0
        %v299 = vpop.trf.xlu0
        %v300 = vpop.trf.xlu0
        %v301 = vpop.trf.xlu0
        %v302 = vpop.trf.xlu0
        %v303 = vpop.trf.xlu0
        %304 = vxpose.xlu0.c.b16.start [1/8] %v285, 128
        %305 = vxpose.xlu0.c.b16.cont [2/8] 0, 128
        %306 = vxpose.xlu0.c.b16.cont [3/8] 0, 128
        %307 = vxpose.xlu0.c.b16.cont [4/8] 0, 128
        %308 = vxpose.xlu0.c.b16.cont [5/8] 0, 128
        %309 = vxpose.xlu0.c.b16.cont [6/8] 0, 128
        %310 = vxpose.xlu0.c.b16.cont [7/8] 0, 128
        %311 = vxpose.xlu0.c.b16.end [8/8] 0, 128
        %v312 = vpop.trf.xlu0
        %v313 = vpop.trf.xlu0
        %v314 = vpop.trf.xlu0
        %v315 = vpop.trf.xlu0
        %v316 = vpop.trf.xlu0
        %v317 = vpop.trf.xlu0
        %v318 = vpop.trf.xlu0
        %v319 = vpop.trf.xlu0
        %v322 = vrot.slane %v284, 2
        %v323 = vrot.slane %v285, 2
        %v325 = vsel %vm230, %v296, 0
        %v328 = vsel %vm230, %v297, 0
        %v331 = vsel %vm230, %v298, 0
        %v334 = vsel %vm230, %v299, 0
        %v337 = vsel %vm230, %v300, 0
        %v340 = vsel %vm230, %v301, 0
        %v343 = vsel %vm230, %v302, 0
        %v346 = vsel %vm230, %v303, 0
        %v349 = vsel %vm230, %v312, 0
        %v352 = vsel %vm230, %v313, 0
        %v355 = vsel %vm230, %v314, 0
        %v358 = vsel %vm230, %v315, 0
        %v361 = vsel %vm230, %v316, 0
        %v364 = vsel %vm230, %v317, 0
        %v367 = vsel %vm230, %v318, 0
        %v370 = vsel %vm230, %v319, 0
        %v373 = vsel %vm234, %v322, 0
        %v376 = vsel %vm234, %v323, 0
        %378 = vmatprep.subr.bf16.mxu0 %v376
        %379 = vmatpush1.bf16.msra.mxu0 %v373
        %380 = vmatprep.subr.bf16.mxu0 0
        %381 = vmatpush1.bf16.msra.mxu0 0
        %382 = vmatprep.subr.bf16.mxu0 0
        %383 = vmatpush1.bf16.msra.mxu0 0
        %384 = vmatprep.subr.bf16.mxu0 0
        %385 = vmatpush1.bf16.msra.mxu0 0
        %386 = vmatprep.subr.bf16.mxu0 0
        %387 = vmatpush1.bf16.msra.mxu0 0
        %388 = vmatprep.subr.bf16.mxu0 0
        %389 = vmatpush1.bf16.msra.mxu0 0
        %390 = vmatprep.subr.bf16.mxu0 0
        %391 = vmatpush1.bf16.msra.mxu0 0
        %392 = vmatprep.subr.bf16.mxu0 0
        %393 = vmatpush1.bf16.msra.mxu0 0
        %394 = vmatprep.subr.bf16.mxu0 0
        %395 = vmatpush1.bf16.msra.mxu0 0
        %396 = vmatprep.subr.bf16.mxu0 0
        %397 = vmatpush1.bf16.msra.mxu0 0
        %398 = vmatprep.subr.bf16.mxu0 0
        %399 = vmatpush1.bf16.msra.mxu0 0
        %400 = vmatprep.subr.bf16.mxu0 0
        %401 = vmatpush1.bf16.msra.mxu0 0
        %402 = vmatprep.subr.bf16.mxu0 0
        %403 = vmatpush1.bf16.msra.mxu0 0
        %404 = vmatprep.subr.bf16.mxu0 0
        %405 = vmatpush1.bf16.msra.mxu0 0
        %406 = vmatprep.subr.bf16.mxu0 0
        %407 = vmatpush1.bf16.msra.mxu0 0
        %408 = vmatprep.subr.bf16.mxu0 0
        %409 = vmatpush1.bf16.msra.mxu0 0
        %410 = vmatprep.mubr.bf16.mxu0 0
        %411 = vmatmul.mubr.bf16.gmra.mrb[0].mxu0 %v325
        %v412 = vpop.f32.mrb[0].mxu0
        %v413 = vadd.f32 0.0, %v412
        %v414 = vpop.f32.mrb[0].mxu0
        %v415 = vadd.f32 0.0, %v414
        %v416 = vpop.f32.mrb[0].mxu0
        %v417 = vadd.f32 0.0, %v416
        %v418 = vpop.f32.mrb[0].mxu0
        %v419 = vadd.f32 0.0, %v418
        %420 = vmatprep.mubr.bf16.mxu0 0
        %421 = vmatmul.mubr.bf16.gmra.mrb[0].mxu0 %v328
        %v422 = vpop.f32.mrb[0].mxu0
        %v423 = vadd.f32 0.0, %v422
        %v424 = vpop.f32.mrb[0].mxu0
        %v425 = vadd.f32 0.0, %v424
        %v426 = vpop.f32.mrb[0].mxu0
        %v427 = vadd.f32 0.0, %v426
        %v428 = vpop.f32.mrb[0].mxu0
        %v429 = vadd.f32 0.0, %v428
        %430 = vmatprep.mubr.bf16.mxu0 0
        %431 = vmatmul.mubr.bf16.gmra.mrb[0].mxu0 %v331
        %v432 = vpop.f32.mrb[0].mxu0
        %v433 = vadd.f32 0.0, %v432
        %v434 = vpop.f32.mrb[0].mxu0
        %v435 = vadd.f32 0.0, %v434
        %v436 = vpop.f32.mrb[0].mxu0
        %v437 = vadd.f32 0.0, %v436
        %v438 = vpop.f32.mrb[0].mxu0
        %v439 = vadd.f32 0.0, %v438
        %440 = vmatprep.mubr.bf16.mxu0 0
        %441 = vmatmul.mubr.bf16.gmra.mrb[0].mxu0 %v334
        %v442 = vpop.f32.mrb[0].mxu0
        %v443 = vadd.f32 0.0, %v442
        %v444 = vpop.f32.mrb[0].mxu0
        %v445 = vadd.f32 0.0, %v444
        %v446 = vpop.f32.mrb[0].mxu0
        %v447 = vadd.f32 0.0, %v446
        %v448 = vpop.f32.mrb[0].mxu0
        %v449 = vadd.f32 0.0, %v448
        %450 = vmatprep.mubr.bf16.mxu0 0
        %451 = vmatmul.mubr.bf16.gmra.mrb[0].mxu0 %v337
        %v452 = vpop.f32.mrb[0].mxu0
        %v453 = vadd.f32 0.0, %v452
        %v454 = vpop.f32.mrb[0].mxu0
        %v455 = vadd.f32 0.0, %v454
        %v456 = vpop.f32.mrb[0].mxu0
        %v457 = vadd.f32 0.0, %v456
        %v458 = vpop.f32.mrb[0].mxu0
        %v459 = vadd.f32 0.0, %v458
        %460 = vmatprep.mubr.bf16.mxu0 0
        %461 = vmatmul.mubr.bf16.gmra.mrb[0].mxu0 %v340
        %v462 = vpop.f32.mrb[0].mxu0
        %v463 = vadd.f32 0.0, %v462
        %v464 = vpop.f32.mrb[0].mxu0
        %v465 = vadd.f32 0.0, %v464
        %v466 = vpop.f32.mrb[0].mxu0
        %v467 = vadd.f32 0.0, %v466
        %v468 = vpop.f32.mrb[0].mxu0
        %v469 = vadd.f32 0.0, %v468
        %470 = vmatprep.mubr.bf16.mxu0 0
        %471 = vmatmul.mubr.bf16.gmra.mrb[0].mxu0 %v343
        %v472 = vpop.f32.mrb[0].mxu0
        %v473 = vadd.f32 0.0, %v472
        %v474 = vpop.f32.mrb[0].mxu0
        %v475 = vadd.f32 0.0, %v474
        %v476 = vpop.f32.mrb[0].mxu0
        %v477 = vadd.f32 0.0, %v476
        %v478 = vpop.f32.mrb[0].mxu0
        %v479 = vadd.f32 0.0, %v478
        %480 = vmatprep.mubr.bf16.mxu0 0
        %481 = vmatmul.mubr.bf16.gmra.mrb[0].mxu0 %v346
        %v482 = vpop.f32.mrb[0].mxu0
        %v483 = vadd.f32 0.0, %v482
        %v484 = vpop.f32.mrb[0].mxu0
        %v485 = vadd.f32 0.0, %v484
        %v486 = vpop.f32.mrb[0].mxu0
        %v487 = vadd.f32 0.0, %v486
        %v488 = vpop.f32.mrb[0].mxu0
        %v489 = vadd.f32 0.0, %v488
        %490 = vmatprep.mubr.bf16.mxu0 0
        %491 = vmatmul.mubr.bf16.gmra.mrb[0].mxu0 %v349
        %v492 = vpop.f32.mrb[0].mxu0
        %v493 = vadd.f32 0.0, %v492
        %v494 = vpop.f32.mrb[0].mxu0
        %v495 = vadd.f32 0.0, %v494
        %v496 = vpop.f32.mrb[0].mxu0
        %v497 = vadd.f32 0.0, %v496
        %v498 = vpop.f32.mrb[0].mxu0
        %v499 = vadd.f32 0.0, %v498
        %500 = vmatprep.mubr.bf16.mxu0 0
        %501 = vmatmul.mubr.bf16.gmra.mrb[0].mxu0 %v352
        %v502 = vpop.f32.mrb[0].mxu0
        %v503 = vadd.f32 0.0, %v502
        %v504 = vpop.f32.mrb[0].mxu0
        %v505 = vadd.f32 0.0, %v504
        %v506 = vpop.f32.mrb[0].mxu0
        %v507 = vadd.f32 0.0, %v506
        %v508 = vpop.f32.mrb[0].mxu0
        %v509 = vadd.f32 0.0, %v508
        %510 = vmatprep.mubr.bf16.mxu0 0
        %511 = vmatmul.mubr.bf16.gmra.mrb[0].mxu0 %v355
        %v512 = vpop.f32.mrb[0].mxu0
        %v513 = vadd.f32 0.0, %v512
        %v514 = vpop.f32.mrb[0].mxu0
        %v515 = vadd.f32 0.0, %v514
        %v516 = vpop.f32.mrb[0].mxu0
        %v517 = vadd.f32 0.0, %v516
        %v518 = vpop.f32.mrb[0].mxu0
        %v519 = vadd.f32 0.0, %v518
        %520 = vmatprep.mubr.bf16.mxu0 0
        %521 = vmatmul.mubr.bf16.gmra.mrb[0].mxu0 %v358
        %v522 = vpop.f32.mrb[0].mxu0
        %v523 = vadd.f32 0.0, %v522
        %v524 = vpop.f32.mrb[0].mxu0
        %v525 = vadd.f32 0.0, %v524
        %v526 = vpop.f32.mrb[0].mxu0
        %v527 = vadd.f32 0.0, %v526
        %v528 = vpop.f32.mrb[0].mxu0
        %v529 = vadd.f32 0.0, %v528
        %530 = vmatprep.mubr.bf16.mxu0 0
        %531 = vmatmul.mubr.bf16.gmra.mrb[0].mxu0 %v361
        %v532 = vpop.f32.mrb[0].mxu0
        %v533 = vadd.f32 0.0, %v532
        %v534 = vpop.f32.mrb[0].mxu0
        %v535 = vadd.f32 0.0, %v534
        %v536 = vpop.f32.mrb[0].mxu0
        %v537 = vadd.f32 0.0, %v536
        %v538 = vpop.f32.mrb[0].mxu0
        %v539 = vadd.f32 0.0, %v538
        %540 = vmatprep.mubr.bf16.mxu0 0
        %541 = vmatmul.mubr.bf16.gmra.mrb[0].mxu0 %v364
        %v542 = vpop.f32.mrb[0].mxu0
        %v543 = vadd.f32 0.0, %v542
        %v544 = vpop.f32.mrb[0].mxu0
        %v545 = vadd.f32 0.0, %v544
        %v546 = vpop.f32.mrb[0].mxu0
        %v547 = vadd.f32 0.0, %v546
        %v548 = vpop.f32.mrb[0].mxu0
        %v549 = vadd.f32 0.0, %v548
        %550 = vmatprep.mubr.bf16.mxu0 0
        %551 = vmatmul.mubr.bf16.gmra.mrb[0].mxu0 %v367
        %v552 = vpop.f32.mrb[0].mxu0
        %v553 = vadd.f32 0.0, %v552
        %v554 = vpop.f32.mrb[0].mxu0
        %v555 = vadd.f32 0.0, %v554
        %v556 = vpop.f32.mrb[0].mxu0
        %v557 = vadd.f32 0.0, %v556
        %v558 = vpop.f32.mrb[0].mxu0
        %v559 = vadd.f32 0.0, %v558
        %560 = vmatprep.mubr.bf16.mxu0 0
        %561 = vmatmul.mubr.bf16.gmra.mrb[0].mxu0 %v370
        %v562 = vpop.f32.mrb[0].mxu0
        %v563 = vadd.f32 0.0, %v562
        %v564 = vpop.f32.mrb[0].mxu0
        %v565 = vadd.f32 0.0, %v564
        %v566 = vpop.f32.mrb[0].mxu0
        %v567 = vadd.f32 0.0, %v566
        %v568 = vpop.f32.mrb[0].mxu0
        %v569 = vadd.f32 0.0, %v568
        %570 = vdwg.mxu0
        %v571 = vmax.f32 %v413, %v415
        %572 = vmax.xlane.f32.xlu0 %v571
        %v573 = vpop.xlane.xlu0 %572
        %v574 = vmax.f32 %v417, %v419
        %575 = vmax.xlane.f32.xlu0 %v574
        %v576 = vpop.xlane.xlu0 %575
        %v577 = vmax.f32 %v423, %v425
        %578 = vmax.xlane.f32.xlu0 %v577
        %v579 = vpop.xlane.xlu0 %578
        %v580 = vmax.f32 %v427, %v429
        %581 = vmax.xlane.f32.xlu0 %v580
        %v582 = vpop.xlane.xlu0 %581
        %v583 = vmax.f32 %v433, %v435
        %584 = vmax.xlane.f32.xlu0 %v583
        %v585 = vpop.xlane.xlu0 %584
        %v586 = vmax.f32 %v437, %v439
        %587 = vmax.xlane.f32.xlu0 %v586
        %v588 = vpop.xlane.xlu0 %587
        %v589 = vmax.f32 %v443, %v445
        %590 = vmax.xlane.f32.xlu0 %v589
        %v591 = vpop.xlane.xlu0 %590
        %v592 = vmax.f32 %v447, %v449
        %593 = vmax.xlane.f32.xlu0 %v592
        %v594 = vpop.xlane.xlu0 %593
        %v595 = vmax.f32 %v453, %v455
        %596 = vmax.xlane.f32.xlu0 %v595
        %v597 = vpop.xlane.xlu0 %596
        %v598 = vmax.f32 %v457, %v459
        %599 = vmax.xlane.f32.xlu0 %v598
        %v600 = vpop.xlane.xlu0 %599
        %v601 = vmax.f32 %v463, %v465
        %602 = vmax.xlane.f32.xlu0 %v601
        %v603 = vpop.xlane.xlu0 %602
        %v604 = vmax.f32 %v467, %v469
        %605 = vmax.xlane.f32.xlu0 %v604
        %v606 = vpop.xlane.xlu0 %605
        %v607 = vmax.f32 %v473, %v475
        %608 = vmax.xlane.f32.xlu0 %v607
        %v609 = vpop.xlane.xlu0 %608
        %v610 = vmax.f32 %v477, %v479
        %611 = vmax.xlane.f32.xlu0 %v610
        %v612 = vpop.xlane.xlu0 %611
        %v613 = vmax.f32 %v483, %v485
        %614 = vmax.xlane.f32.xlu0 %v613
        %v615 = vpop.xlane.xlu0 %614
        %v616 = vmax.f32 %v487, %v489
        %617 = vmax.xlane.f32.xlu0 %v616
        %v618 = vpop.xlane.xlu0 %617
        %v619 = vmax.f32 %v493, %v495
        %620 = vmax.xlane.f32.xlu0 %v619
        %v621 = vpop.xlane.xlu0 %620
        %v622 = vmax.f32 %v497, %v499
        %623 = vmax.xlane.f32.xlu0 %v622
        %v624 = vpop.xlane.xlu0 %623
        %v625 = vmax.f32 %v503, %v505
        %626 = vmax.xlane.f32.xlu0 %v625
        %v627 = vpop.xlane.xlu0 %626
        %v628 = vmax.f32 %v507, %v509
        %629 = vmax.xlane.f32.xlu0 %v628
        %v630 = vpop.xlane.xlu0 %629
        %v631 = vmax.f32 %v513, %v515
        %632 = vmax.xlane.f32.xlu0 %v631
        %v633 = vpop.xlane.xlu0 %632
        %v634 = vmax.f32 %v517, %v519
        %635 = vmax.xlane.f32.xlu0 %v634
        %v636 = vpop.xlane.xlu0 %635
        %v637 = vmax.f32 %v523, %v525
        %638 = vmax.xlane.f32.xlu0 %v637
        %v639 = vpop.xlane.xlu0 %638
        %v640 = vmax.f32 %v527, %v529
        %641 = vmax.xlane.f32.xlu0 %v640
        %v642 = vpop.xlane.xlu0 %641
        %v643 = vmax.f32 %v533, %v535
        %644 = vmax.xlane.f32.xlu0 %v643
        %v645 = vpop.xlane.xlu0 %644
        %v646 = vmax.f32 %v537, %v539
        %647 = vmax.xlane.f32.xlu0 %v646
        %v648 = vpop.xlane.xlu0 %647
        %v649 = vmax.f32 %v543, %v545
        %650 = vmax.xlane.f32.xlu0 %v649
        %v651 = vpop.xlane.xlu0 %650
        %v652 = vmax.f32 %v547, %v549
        %653 = vmax.xlane.f32.xlu0 %v652
        %v654 = vpop.xlane.xlu0 %653
        %v655 = vmax.f32 %v553, %v555
        %656 = vmax.xlane.f32.xlu0 %v655
        %v657 = vpop.xlane.xlu0 %656
        %v658 = vmax.f32 %v557, %v559
        %659 = vmax.xlane.f32.xlu0 %v658
        %v660 = vpop.xlane.xlu0 %659
        %v661 = vmax.f32 %v563, %v565
        %662 = vmax.xlane.f32.xlu0 %v661
        %v663 = vpop.xlane.xlu0 %662
        %v664 = vmax.f32 %v567, %v569
        %665 = vmax.xlane.f32.xlu0 %v664
        %v666 = vpop.xlane.xlu0 %665
        %v667 = vsub.f32 %v413, %v573
        %v668 = vsub.f32 %v415, %v573
        %v669 = vsub.f32 %v417, %v576
        %v670 = vsub.f32 %v419, %v576
        %v671 = vsub.f32 %v423, %v579
        %v672 = vsub.f32 %v425, %v579
        %v673 = vsub.f32 %v427, %v582
        %v674 = vsub.f32 %v429, %v582
        %v675 = vsub.f32 %v433, %v585
        %v676 = vsub.f32 %v435, %v585
        %v677 = vsub.f32 %v437, %v588
        %v678 = vsub.f32 %v439, %v588
        %v679 = vsub.f32 %v443, %v591
        %v680 = vsub.f32 %v445, %v591
        %v681 = vsub.f32 %v447, %v594
        %v682 = vsub.f32 %v449, %v594
        %v683 = vsub.f32 %v453, %v597
        %v684 = vsub.f32 %v455, %v597
        %v685 = vsub.f32 %v457, %v600
        %v686 = vsub.f32 %v459, %v600
        %v687 = vsub.f32 %v463, %v603
        %v688 = vsub.f32 %v465, %v603
        %v689 = vsub.f32 %v467, %v606
        %v690 = vsub.f32 %v469, %v606
        %v691 = vsub.f32 %v473, %v609
        %v692 = vsub.f32 %v475, %v609
        %v693 = vsub.f32 %v477, %v612
        %v694 = vsub.f32 %v479, %v612
        %v695 = vsub.f32 %v483, %v615
        %v696 = vsub.f32 %v485, %v615
        %v697 = vsub.f32 %v487, %v618
        %v698 = vsub.f32 %v489, %v618
        %v699 = vsub.f32 %v493, %v621
        %v700 = vsub.f32 %v495, %v621
        %v701 = vsub.f32 %v497, %v624
        %v702 = vsub.f32 %v499, %v624
        %v703 = vsub.f32 %v503, %v627
        %v704 = vsub.f32 %v505, %v627
        %v705 = vsub.f32 %v507, %v630
        %v706 = vsub.f32 %v509, %v630
        %v707 = vsub.f32 %v513, %v633
        %v708 = vsub.f32 %v515, %v633
        %v709 = vsub.f32 %v517, %v636
        %v710 = vsub.f32 %v519, %v636
        %v711 = vsub.f32 %v523, %v639
        %v712 = vsub.f32 %v525, %v639
        %v713 = vsub.f32 %v527, %v642
        %v714 = vsub.f32 %v529, %v642
        %v715 = vsub.f32 %v533, %v645
        %v716 = vsub.f32 %v535, %v645
        %v717 = vsub.f32 %v537, %v648
        %v718 = vsub.f32 %v539, %v648
        %v719 = vsub.f32 %v543, %v651
        %v720 = vsub.f32 %v545, %v651
        %v721 = vsub.f32 %v547, %v654
        %v722 = vsub.f32 %v549, %v654
        %v723 = vsub.f32 %v553, %v657
        %v724 = vsub.f32 %v555, %v657
        %v725 = vsub.f32 %v557, %v660
        %v726 = vsub.f32 %v559, %v660
        %v727 = vsub.f32 %v563, %v663
        %v728 = vsub.f32 %v565, %v663
        %v729 = vsub.f32 %v567, %v666
        %v730 = vsub.f32 %v569, %v666
        %v731 = vmul.f32 %v667, 1.442695
        %v732 = vpow.pop %v731
        %v733 = vmul.f32 %v668, 1.442695
        %v734 = vpow.pop %v733
        %v735 = vmul.f32 %v669, 1.442695
        %v736 = vpow.pop %v735
        %v737 = vmul.f32 %v670, 1.442695
        %v738 = vpow.pop %v737
        %v739 = vmul.f32 %v671, 1.442695
        %v740 = vpow.pop %v739
        %v741 = vmul.f32 %v672, 1.442695
        %v742 = vpow.pop %v741
        %v743 = vmul.f32 %v673, 1.442695
        %v744 = vpow.pop %v743
        %v745 = vmul.f32 %v674, 1.442695
        %v746 = vpow.pop %v745
        %v747 = vmul.f32 %v675, 1.442695
        %v748 = vpow.pop %v747
        %v749 = vmul.f32 %v676, 1.442695
        %v750 = vpow.pop %v749
        %v751 = vmul.f32 %v677, 1.442695
        %v752 = vpow.pop %v751
        %v753 = vmul.f32 %v678, 1.442695
        %v754 = vpow.pop %v753
        %v755 = vmul.f32 %v679, 1.442695
        %v756 = vpow.pop %v755
        %v757 = vmul.f32 %v680, 1.442695
        %v758 = vpow.pop %v757
        %v759 = vmul.f32 %v681, 1.442695
        %v760 = vpow.pop %v759
        %v761 = vmul.f32 %v682, 1.442695
        %v762 = vpow.pop %v761
        %v763 = vmul.f32 %v683, 1.442695
        %v764 = vpow.pop %v763
        %v765 = vmul.f32 %v684, 1.442695
        %v766 = vpow.pop %v765
        %v767 = vmul.f32 %v685, 1.442695
        %v768 = vpow.pop %v767
        %v769 = vmul.f32 %v686, 1.442695
        %v770 = vpow.pop %v769
        %v771 = vmul.f32 %v687, 1.442695
        %v772 = vpow.pop %v771
        %v773 = vmul.f32 %v688, 1.442695
        %v774 = vpow.pop %v773
        %v775 = vmul.f32 %v689, 1.442695
        %v776 = vpow.pop %v775
        %v777 = vmul.f32 %v690, 1.442695
        %v778 = vpow.pop %v777
        %v779 = vmul.f32 %v691, 1.442695
        %v780 = vpow.pop %v779
        %v781 = vmul.f32 %v692, 1.442695
        %v782 = vpow.pop %v781
        %v783 = vmul.f32 %v693, 1.442695
        %v784 = vpow.pop %v783
        %v785 = vmul.f32 %v694, 1.442695
        %v786 = vpow.pop %v785
        %v787 = vmul.f32 %v695, 1.442695
        %v788 = vpow.pop %v787
        %v789 = vmul.f32 %v696, 1.442695
        %v790 = vpow.pop %v789
        %v791 = vmul.f32 %v697, 1.442695
        %v792 = vpow.pop %v791
        %v793 = vmul.f32 %v698, 1.442695
        %v794 = vpow.pop %v793
        %v795 = vmul.f32 %v699, 1.442695
        %v796 = vpow.pop %v795
        %v797 = vmul.f32 %v700, 1.442695
        %v798 = vpow.pop %v797
        %v799 = vmul.f32 %v701, 1.442695
        %v800 = vpow.pop %v799
        %v801 = vmul.f32 %v702, 1.442695
        %v802 = vpow.pop %v801
        %v803 = vmul.f32 %v703, 1.442695
        %v804 = vpow.pop %v803
        %v805 = vmul.f32 %v704, 1.442695
        %v806 = vpow.pop %v805
        %v807 = vmul.f32 %v705, 1.442695
        %v808 = vpow.pop %v807
        %v809 = vmul.f32 %v706, 1.442695
        %v810 = vpow.pop %v809
        %v811 = vmul.f32 %v707, 1.442695
        %v812 = vpow.pop %v811
        %v813 = vmul.f32 %v708, 1.442695
        %v814 = vpow.pop %v813
        %v815 = vmul.f32 %v709, 1.442695
        %v816 = vpow.pop %v815
        %v817 = vmul.f32 %v710, 1.442695
        %v818 = vpow.pop %v817
        %v819 = vmul.f32 %v711, 1.442695
        %v820 = vpow.pop %v819
        %v821 = vmul.f32 %v712, 1.442695
        %v822 = vpow.pop %v821
        %v823 = vmul.f32 %v713, 1.442695
        %v824 = vpow.pop %v823
        %v825 = vmul.f32 %v714, 1.442695
        %v826 = vpow.pop %v825
        %v827 = vmul.f32 %v715, 1.442695
        %v828 = vpow.pop %v827
        %v829 = vmul.f32 %v716, 1.442695
        %v830 = vpow.pop %v829
        %v831 = vmul.f32 %v717, 1.442695
        %v832 = vpow.pop %v831
        %v833 = vmul.f32 %v718, 1.442695
        %v834 = vpow.pop %v833
        %v835 = vmul.f32 %v719, 1.442695
        %v836 = vpow.pop %v835
        %v837 = vmul.f32 %v720, 1.442695
        %v838 = vpow.pop %v837
        %v839 = vmul.f32 %v721, 1.442695
        %v840 = vpow.pop %v839
        %v841 = vmul.f32 %v722, 1.442695
        %v842 = vpow.pop %v841
        %v843 = vmul.f32 %v723, 1.442695
        %v844 = vpow.pop %v843
        %v845 = vmul.f32 %v724, 1.442695
        %v846 = vpow.pop %v845
        %v847 = vmul.f32 %v725, 1.442695
        %v848 = vpow.pop %v847
        %v849 = vmul.f32 %v726, 1.442695
        %v850 = vpow.pop %v849
        %v851 = vmul.f32 %v727, 1.442695
        %v852 = vpow.pop %v851
        %v853 = vmul.f32 %v728, 1.442695
        %v854 = vpow.pop %v853
        %v855 = vmul.f32 %v729, 1.442695
        %v856 = vpow.pop %v855
        %v857 = vmul.f32 %v730, 1.442695
        %v858 = vpow.pop %v857
        %v859 = vadd.f32 %v732, %v734
        %860 = vadd.xlane.f32.xlu0 %v859
        %v861 = vpop.xlane.xlu0 %860
        %v862 = vadd.f32 %v736, %v738
        %863 = vadd.xlane.f32.xlu0 %v862
        %v864 = vpop.xlane.xlu0 %863
        %v865 = vadd.f32 %v740, %v742
        %866 = vadd.xlane.f32.xlu0 %v865
        %v867 = vpop.xlane.xlu0 %866
        %v868 = vadd.f32 %v744, %v746
        %869 = vadd.xlane.f32.xlu0 %v868
        %v870 = vpop.xlane.xlu0 %869
        %v871 = vadd.f32 %v748, %v750
        %872 = vadd.xlane.f32.xlu0 %v871
        %v873 = vpop.xlane.xlu0 %872
        %v874 = vadd.f32 %v752, %v754
        %875 = vadd.xlane.f32.xlu0 %v874
        %v876 = vpop.xlane.xlu0 %875
        %v877 = vadd.f32 %v756, %v758
        %878 = vadd.xlane.f32.xlu0 %v877
        %v879 = vpop.xlane.xlu0 %878
        %v880 = vadd.f32 %v760, %v762
        %881 = vadd.xlane.f32.xlu0 %v880
        %v882 = vpop.xlane.xlu0 %881
        %v883 = vadd.f32 %v764, %v766
        %884 = vadd.xlane.f32.xlu0 %v883
        %v885 = vpop.xlane.xlu0 %884
        %v886 = vadd.f32 %v768, %v770
        %887 = vadd.xlane.f32.xlu0 %v886
        %v888 = vpop.xlane.xlu0 %887
        %v889 = vadd.f32 %v772, %v774
        %890 = vadd.xlane.f32.xlu0 %v889
        %v891 = vpop.xlane.xlu0 %890
        %v892 = vadd.f32 %v776, %v778
        %893 = vadd.xlane.f32.xlu0 %v892
        %v894 = vpop.xlane.xlu0 %893
        %v895 = vadd.f32 %v780, %v782
        %896 = vadd.xlane.f32.xlu0 %v895
        %v897 = vpop.xlane.xlu0 %896
        %v898 = vadd.f32 %v784, %v786
        %899 = vadd.xlane.f32.xlu0 %v898
        %v900 = vpop.xlane.xlu0 %899
        %v901 = vadd.f32 %v788, %v790
        %902 = vadd.xlane.f32.xlu0 %v901
        %v903 = vpop.xlane.xlu0 %902
        %v904 = vadd.f32 %v792, %v794
        %905 = vadd.xlane.f32.xlu0 %v904
        %v906 = vpop.xlane.xlu0 %905
        %v907 = vadd.f32 %v796, %v798
        %908 = vadd.xlane.f32.xlu0 %v907
        %v909 = vpop.xlane.xlu0 %908
        %v910 = vadd.f32 %v800, %v802
        %911 = vadd.xlane.f32.xlu0 %v910
        %v912 = vpop.xlane.xlu0 %911
        %v913 = vadd.f32 %v804, %v806
        %914 = vadd.xlane.f32.xlu0 %v913
        %v915 = vpop.xlane.xlu0 %914
        %v916 = vadd.f32 %v808, %v810
        %917 = vadd.xlane.f32.xlu0 %v916
        %v918 = vpop.xlane.xlu0 %917
        %v919 = vadd.f32 %v812, %v814
        %920 = vadd.xlane.f32.xlu0 %v919
        %v921 = vpop.xlane.xlu0 %920
        %v922 = vadd.f32 %v816, %v818
        %923 = vadd.xlane.f32.xlu0 %v922
        %v924 = vpop.xlane.xlu0 %923
        %v925 = vadd.f32 %v820, %v822
        %926 = vadd.xlane.f32.xlu0 %v925
        %v927 = vpop.xlane.xlu0 %926
        %v928 = vadd.f32 %v824, %v826
        %929 = vadd.xlane.f32.xlu0 %v928
        %v930 = vpop.xlane.xlu0 %929
        %v931 = vadd.f32 %v828, %v830
        %932 = vadd.xlane.f32.xlu0 %v931
        %v933 = vpop.xlane.xlu0 %932
        %v934 = vadd.f32 %v832, %v834
        %935 = vadd.xlane.f32.xlu0 %v934
        %v936 = vpop.xlane.xlu0 %935
        %v937 = vadd.f32 %v836, %v838
        %938 = vadd.xlane.f32.xlu0 %v937
        %v939 = vpop.xlane.xlu0 %938
        %v940 = vadd.f32 %v840, %v842
        %941 = vadd.xlane.f32.xlu0 %v940
        %v942 = vpop.xlane.xlu0 %941
        %v943 = vadd.f32 %v844, %v846
        %944 = vadd.xlane.f32.xlu0 %v943
        %v945 = vpop.xlane.xlu0 %944
        %v946 = vadd.f32 %v848, %v850
        %947 = vadd.xlane.f32.xlu0 %v946
        %v948 = vpop.xlane.xlu0 %947
        %v949 = vadd.f32 %v852, %v854
        %950 = vadd.xlane.f32.xlu0 %v949
        %v951 = vpop.xlane.xlu0 %950
        %v952 = vadd.f32 %v856, %v858
        %953 = vadd.xlane.f32.xlu0 %v952
        %v954 = vpop.xlane.xlu0 %953
        %v955 = vrcp.pop %v861
        %v956 = vrcp.pop %v864
        %v957 = vrcp.pop %v867
        %v958 = vrcp.pop %v870
        %v959 = vrcp.pop %v873
        %v960 = vrcp.pop %v876
        %v961 = vrcp.pop %v879
        %v962 = vrcp.pop %v882
        %v963 = vrcp.pop %v885
        %v964 = vrcp.pop %v888
        %v965 = vrcp.pop %v891
        %v966 = vrcp.pop %v894
        %v967 = vrcp.pop %v897
        %v968 = vrcp.pop %v900
        %v969 = vrcp.pop %v903
        %v970 = vrcp.pop %v906
        %v971 = vrcp.pop %v909
        %v972 = vrcp.pop %v912
        %v973 = vrcp.pop %v915
        %v974 = vrcp.pop %v918
        %v975 = vrcp.pop %v921
        %v976 = vrcp.pop %v924
        %v977 = vrcp.pop %v927
        %v978 = vrcp.pop %v930
        %v979 = vrcp.pop %v933
        %v980 = vrcp.pop %v936
        %v981 = vrcp.pop %v939
        %v982 = vrcp.pop %v942
        %v983 = vrcp.pop %v945
        %v984 = vrcp.pop %v948
        %v985 = vrcp.pop %v951
        %v986 = vrcp.pop %v954
        %v987 = vmul.f32 %v732, %v955
        %v988 = vmul.f32 %v734, %v955
        %v989 = vmul.f32 %v736, %v956
        %v990 = vmul.f32 %v738, %v956
        %v991 = vmul.f32 %v740, %v957
        %v992 = vmul.f32 %v742, %v957
        %v993 = vmul.f32 %v744, %v958
        %v994 = vmul.f32 %v746, %v958
        %v995 = vmul.f32 %v748, %v959
        %v996 = vmul.f32 %v750, %v959
        %v997 = vmul.f32 %v752, %v960
        %v998 = vmul.f32 %v754, %v960
        %v999 = vmul.f32 %v756, %v961
        %v1000 = vmul.f32 %v758, %v961
        %v1001 = vmul.f32 %v760, %v962
        %v1002 = vmul.f32 %v762, %v962
        %v1003 = vmul.f32 %v764, %v963
        %v1004 = vmul.f32 %v766, %v963
        %v1005 = vmul.f32 %v768, %v964
        %v1006 = vmul.f32 %v770, %v964
        %v1007 = vmul.f32 %v772, %v965
        %v1008 = vmul.f32 %v774, %v965
        %v1009 = vmul.f32 %v776, %v966
        %v1010 = vmul.f32 %v778, %v966
        %v1011 = vmul.f32 %v780, %v967
        %v1012 = vmul.f32 %v782, %v967
        %v1013 = vmul.f32 %v784, %v968
        %v1014 = vmul.f32 %v786, %v968
        %v1015 = vmul.f32 %v788, %v969
        %v1016 = vmul.f32 %v790, %v969
        %v1017 = vmul.f32 %v792, %v970
        %v1018 = vmul.f32 %v794, %v970
        %v1019 = vmul.f32 %v796, %v971
        %v1020 = vmul.f32 %v798, %v971
        %v1021 = vmul.f32 %v800, %v972
        %v1022 = vmul.f32 %v802, %v972
        %v1023 = vmul.f32 %v804, %v973
        %v1024 = vmul.f32 %v806, %v973
        %v1025 = vmul.f32 %v808, %v974
        %v1026 = vmul.f32 %v810, %v974
        %v1027 = vmul.f32 %v812, %v975
        %v1028 = vmul.f32 %v814, %v975
        %v1029 = vmul.f32 %v816, %v976
        %v1030 = vmul.f32 %v818, %v976
        %v1031 = vmul.f32 %v820, %v977
        %v1032 = vmul.f32 %v822, %v977
        %v1033 = vmul.f32 %v824, %v978
        %v1034 = vmul.f32 %v826, %v978
        %v1035 = vmul.f32 %v828, %v979
        %v1036 = vmul.f32 %v830, %v979
        %v1037 = vmul.f32 %v832, %v980
        %v1038 = vmul.f32 %v834, %v980
        %v1039 = vmul.f32 %v836, %v981
        %v1040 = vmul.f32 %v838, %v981
        %v1041 = vmul.f32 %v840, %v982
        %v1042 = vmul.f32 %v842, %v982
        %v1043 = vmul.f32 %v844, %v983
        %v1044 = vmul.f32 %v846, %v983
        %v1045 = vmul.f32 %v848, %v984
        %v1046 = vmul.f32 %v850, %v984
        %v1047 = vmul.f32 %v852, %v985
        %v1048 = vmul.f32 %v854, %v985
        %v1049 = vmul.f32 %v856, %v986
        %v1050 = vmul.f32 %v858, %v986
        %v1051 = vpack.c.bf16 %v989, %v987
        %v1052 = vpack.c.bf16 %v990, %v988
        %v1053 = vpack.c.bf16 %v993, %v991
        %v1054 = vpack.c.bf16 %v994, %v992
        %v1055 = vpack.c.bf16 %v997, %v995
        %v1056 = vpack.c.bf16 %v998, %v996
        %v1057 = vpack.c.bf16 %v1001, %v999
        %v1058 = vpack.c.bf16 %v1002, %v1000
        %v1059 = vpack.c.bf16 %v1005, %v1003
        %v1060 = vpack.c.bf16 %v1006, %v1004
        %v1061 = vpack.c.bf16 %v1009, %v1007
        %v1062 = vpack.c.bf16 %v1010, %v1008
        %v1063 = vpack.c.bf16 %v1013, %v1011
        %v1064 = vpack.c.bf16 %v1014, %v1012
        %v1065 = vpack.c.bf16 %v1017, %v1015
        %v1066 = vpack.c.bf16 %v1018, %v1016
        %v1067 = vpack.c.bf16 %v1021, %v1019
        %v1068 = vpack.c.bf16 %v1022, %v1020
        %v1069 = vpack.c.bf16 %v1025, %v1023
        %v1070 = vpack.c.bf16 %v1026, %v1024
        %v1071 = vpack.c.bf16 %v1029, %v1027
        %v1072 = vpack.c.bf16 %v1030, %v1028
        %v1073 = vpack.c.bf16 %v1033, %v1031
        %v1074 = vpack.c.bf16 %v1034, %v1032
        %v1075 = vpack.c.bf16 %v1037, %v1035
        %v1076 = vpack.c.bf16 %v1038, %v1036
        %v1077 = vpack.c.bf16 %v1041, %v1039
        %v1078 = vpack.c.bf16 %v1042, %v1040
        %v1079 = vpack.c.bf16 %v1045, %v1043
        %v1080 = vpack.c.bf16 %v1046, %v1044
        %v1081 = vpack.c.bf16 %v1049, %v1047
        %v1082 = vpack.c.bf16 %v1050, %v1048
        %1083 = vmatprep.subr.bf16.mxu0 %v1052
        %1084 = vmatpush1.bf16.xpose.msra.mxu0 %v1051
        %1085 = vmatprep.subr.bf16.mxu0 %v1054
        %1086 = vmatpush1.bf16.xpose.msra.mxu0 %v1053
        %1087 = vmatprep.subr.bf16.mxu0 %v1056
        %1088 = vmatpush1.bf16.xpose.msra.mxu0 %v1055
        %1089 = vmatprep.subr.bf16.mxu0 %v1058
        %1090 = vmatpush1.bf16.xpose.msra.mxu0 %v1057
        %1091 = vmatprep.subr.bf16.mxu0 %v1060
        %1092 = vmatpush1.bf16.xpose.msra.mxu0 %v1059
        %1093 = vmatprep.subr.bf16.mxu0 %v1062
        %1094 = vmatpush1.bf16.xpose.msra.mxu0 %v1061
        %1095 = vmatprep.subr.bf16.mxu0 %v1064
        %1096 = vmatpush1.bf16.xpose.msra.mxu0 %v1063
        %1097 = vmatprep.subr.bf16.mxu0 %v1066
        %1098 = vmatpush1.bf16.xpose.msra.mxu0 %v1065
        %1099 = vmatprep.subr.bf16.mxu0 %v1068
        %1100 = vmatpush1.bf16.xpose.msra.mxu0 %v1067
        %1101 = vmatprep.subr.bf16.mxu0 %v1070
        %1102 = vmatpush1.bf16.xpose.msra.mxu0 %v1069
        %1103 = vmatprep.subr.bf16.mxu0 %v1072
        %1104 = vmatpush1.bf16.xpose.msra.mxu0 %v1071
        %1105 = vmatprep.subr.bf16.mxu0 %v1074
        %1106 = vmatpush1.bf16.xpose.msra.mxu0 %v1073
        %1107 = vmatprep.subr.bf16.mxu0 %v1076
        %1108 = vmatpush1.bf16.xpose.msra.mxu0 %v1075
        %1109 = vmatprep.subr.bf16.mxu0 %v1078
        %1110 = vmatpush1.bf16.xpose.msra.mxu0 %v1077
        %1111 = vmatprep.subr.bf16.mxu0 %v1080
        %1112 = vmatpush1.bf16.xpose.msra.mxu0 %v1079
        %1113 = vmatprep.subr.bf16.mxu0 %v1082
        %1114 = vmatpush1.bf16.xpose.msra.mxu0 %v1081
        %1115 = vmatprep.mubr.bf16.mxu0 %v287
        %1116 = vmatmul.mubr.bf16.gmra.mrb[0].mxu0 %v286
        %v1117 = vpop.f32.mrb[0].mxu0
        %v1118 = vadd.f32 0.0, %v1117
        %v1119 = vpop.f32.mrb[0].mxu0
        %v1120 = vadd.f32 0.0, %v1119
        %v1121 = vpop.f32.mrb[0].mxu0
        %v1122 = vpop.f32.mrb[0].mxu0
        %1123 = vdwg.mxu0
        %v1124 = vpack.c.bf16 %v1118, %v1118
        %v1125 = vpack.c.bf16 %v1120, %v1120
        %1127 = vset.pattern.permute.xlu0 0
        %1128 = vperm.xlu0 %1127, %v224
        %v1129 = vpop.permute.xlu0 %1128
        %v1132 = vsel %vm230, %v223, 0
        %v1135 = vsel %vm234, %v1124, 0
        %v1138 = vsel %vm234, %v1125, 0
        %1140 = vmatprep.subr.bf16.mxu0 %v1138
        %1141 = vmatpush1.bf16.msra.mxu0 %v1135
        %1142 = vmatprep.subr.bf16.mxu0 0
        %1143 = vmatpush1.bf16.msra.mxu0 0
        %1144 = vmatprep.subr.bf16.mxu0 0
        %1145 = vmatpush1.bf16.msra.mxu0 0
        %1146 = vmatprep.subr.bf16.mxu0 0
        %1147 = vmatpush1.bf16.msra.mxu0 0
        %1148 = vmatprep.subr.bf16.mxu0 0
        %1149 = vmatpush1.bf16.msra.mxu0 0
        %1150 = vmatprep.subr.bf16.mxu0 0
        %1151 = vmatpush1.bf16.msra.mxu0 0
        %1152 = vmatprep.subr.bf16.mxu0 0
        %1153 = vmatpush1.bf16.msra.mxu0 0
        %1154 = vmatprep.subr.bf16.mxu0 0
        %1155 = vmatpush1.bf16.msra.mxu0 0
        %1156 = vmatprep.subr.bf16.mxu0 0
        %1157 = vmatpush1.bf16.msra.mxu0 0
        %1158 = vmatprep.subr.bf16.mxu0 0
        %1159 = vmatpush1.bf16.msra.mxu0 0
        %1160 = vmatprep.subr.bf16.mxu0 0
        %1161 = vmatpush1.bf16.msra.mxu0 0
        %1162 = vmatprep.subr.bf16.mxu0 0
        %1163 = vmatpush1.bf16.msra.mxu0 0
        %1164 = vmatprep.subr.bf16.mxu0 0
        %1165 = vmatpush1.bf16.msra.mxu0 0
        %1166 = vmatprep.subr.bf16.mxu0 0
        %1167 = vmatpush1.bf16.msra.mxu0 0
        %1168 = vmatprep.subr.bf16.mxu0 0
        %1169 = vmatpush1.bf16.msra.mxu0 0
        %1170 = vmatprep.subr.bf16.mxu0 0
        %1171 = vmatpush1.bf16.msra.mxu0 0
        %1172 = vmatprep.mubr.bf16.mxu0 0
        %1173 = vmatmul.mubr.bf16.gmra.mrb[0].mxu0 %v1132
        %v1174 = vpop.f32.mrb[0].mxu0
        %v1175 = vadd.f32 %v1129, %v1174
        %v1176 = vpop.f32.mrb[0].mxu0
        %v1177 = vadd.f32 %v1129, %v1176
        %v1178 = vpop.f32.mrb[0].mxu0
        %v1179 = vpop.f32.mrb[0].mxu0
        %1180 = vdwg.mxu0
        %v1181 = vxor.u32 %v1175, 2147483648
        %v1182 = vxor.u32 %v1177, 2147483648
        %v1183 = vmul.f32 %v1181, 1.442695
        %v1184 = vpow.pop %v1183
        %v1185 = vmul.f32 %v1182, 1.442695
        %v1186 = vpow.pop %v1185
        %v1187 = vadd.f32 %v1184, 1.0
        %v1188 = vadd.f32 %v1186, 1.0
        %v1189 = vrcp.pop %v1187
        %v1190 = vmul.f32 1.0, %v1189
        %v1191 = vrcp.pop %v1188
        %v1192 = vmul.f32 1.0, %v1191
        %v1193 = vmul.f32 %v1190, %v215
        %v1194 = vmul.f32 %v1192, %v217
        %v1197 = vcombine.low %v1193, %v1194
        %1199 = vst [vmem:[%s213] sm:$0xff] %v1197
        %s1200 = sand.u32 %s118, 1
        %s1201 = scalar_lea.sflag [#allocation4], %s1200
        %s1202 = sand.u32 %s118, 1
        %s1203 = smul.addr %s1202, 8
        %s1204 = scalar_lea.vmem [#allocation5], %s1203
        // Predicated region
        $region41: #{tpu_custom_call.1} parent=35 // pred_check
          %p1205 = pneg %p128
        $region42: #{tpu_custom_call.1} parent=35 // pred_check_branch
          %1207 = sbr.rel (%p1205) target = $region44
        $region43: #{tpu_custom_call.1} parent=35 // pred_region
          %s1209 = ssub.s32 128, 128
          %1210 = vsyncadd %s1201, %s1209
          %s1211 = smul.addr %s21, 2
          %s1212 = smul.addr %s1211, 64
          %s1213 = scalar_lea.hbm %s4, %s1212
          %s1215 = sshll.u32 %s1204, 4
          %s1216 = int_to_ptr.vmem [resolvable:$true] %s1215
          %1218 = dma.vmem_to_hbm [thread:$0]  %s1216, 128, %s1213, %s1201
        $region44: #{tpu_custom_call.1} parent=35 // pred_fallthru
          _
      $region36: #{tpu_custom_call.1} parent=5 // pred_fallthru
        _
      %p1219 = scmp.le.s32.totalorder 2, %s16
      // Predicated region
      $region45: #{tpu_custom_call.1} parent=5 // pred_check
        %p1220 = pneg %p1219
      $region46: #{tpu_custom_call.1} parent=5 // pred_check_branch
        %1222 = sbr.rel (%p1220) target = $region48
      $region47: #{tpu_custom_call.1} parent=5 // pred_region
        %s1223 = ssub.s32 %s16, 2
        // Predicated region
        $region49: #{tpu_custom_call.1} parent=47 // pred_check
          %p1224 = pneg %p134
        $region50: #{tpu_custom_call.1} parent=47 // pred_check_branch
          %1226 = sbr.rel (%p1224) target = $region52
        $region51: #{tpu_custom_call.1} parent=47 // pred_region
          %s1227 = sand.u32 %s119, 1
          %s1228 = scalar_lea.sflag [#allocation4], %s1227
          %s1229 = sand.u32 %s119, 1
          %s1230 = smul.addr %s1229, 8
          %s1231 = scalar_lea.vmem [#allocation5], %s1230
          %1232 = dma.done %s1228, 128
        $region52: #{tpu_custom_call.1} parent=47 // pred_fallthru
          _
      $region48: #{tpu_custom_call.1} parent=5 // pred_fallthru
        _
    $region6: #{tpu_custom_call.1} parent=1 // loop_footer
      %s20 = sadd.s32 1, %s16
    $region7: #{tpu_custom_call.1} parent=1 // loop_footer_branch
      %15 = sbr.rel target = $region3
    $region8: #{tpu_custom_call.1} parent=1 // loop_exit
      _
    %1233 = vsyncpa [#allocation3], 1
    %s1234 = scalar_lea.sflag [#allocation3], 1
    %1235 = vsyncpa %s1234, 1
    %1236 = vsyncpa [#allocation4], 1
    %s1237 = scalar_lea.sflag [#allocation4], 1
    %1238 = vsyncpa %s1237, 1

</llo_original>
